<compile_context>
chip_gen: v6e
topology: v6e:2x2x1
jax: 0.10.0
libtpu: 0.0.40
codegen_flags: <defaults>
</compile_context>

<pallas_src>
import functools

import jax
import jax.numpy as jnp
from jax.experimental import pallas as pl
from jax.experimental.pallas import tpu as pltpu


def _conv1d_block_kernel(x_ref, w_ref, p_ref, gs_ref, gb_ref, sm_ref, sb_ref,
                         o_ref, *, k_taps, c_in):
    """One block of `block_batch` batch elements, folded along the lane axis.

    x_ref:  (C_in, Lb)      bf16; per-batch windows [pad | x | pad], zero-padded
                            up to Lb = multiple of 128 lanes
    w_ref:  (C_out, K*C_in) bf16; tap-major columns
    p_ref:  (C_out, 3)      f32; columns = (bias, gamma, beta)
    gs_ref: (G, C_out)      f32; 1/group_size on same-group entries (chan->group avg)
    gb_ref: (C_out, G)      f32; 1.0 on same-group entries (group->chan broadcast)
    sm_ref: (Lb, Bb)        f32; 1/T_out on (valid column of batch b, b) (time avg)
    sb_ref: (Bb, Lb)        f32; 1.0 on (b, any column of batch b's window)
    o_ref:  (C_out, Lb)
    """
    xb = x_ref[...]                                  # (C_in, Lb) bf16
    w = w_ref[...]                                   # (C_out, K*C_in) bf16

    # ---- Conv1d: K shifted-tap matmuls accumulated in f32 -------------------
    # y[:, j] = sum_k W_k @ x[:, j+k]; the shift is applied to the f32 partial
    # product (cheap lane relayout), so the bf16 input is read exactly once.
    # Wrapped columns only land in per-window garbage positions (masked below).
    y = jnp.dot(w[:, 0:c_in], xb, preferred_element_type=jnp.float32)
    for k in range(1, k_taps):
        pk = jnp.dot(w[:, k * c_in:(k + 1) * c_in], xb,
                     preferred_element_type=jnp.float32)
        y = y + jnp.concatenate([pk[:, k:], pk[:, :k]], axis=1)

    bias = p_ref[:, 0:1]
    gamma = p_ref[:, 1:2]
    beta = p_ref[:, 2:3]
    y = y + bias                                     # (C_out, Lb) f32

    # ---- GroupNorm (biased variance, eps=1e-5): reduce over time first ------
    sm = sm_ref[...]
    sb = sb_ref[...]
    gs = gs_ref[...]
    gb = gb_ref[...]
    # per-(channel,batch) time means -> per-(group,batch) -> broadcast to channels
    mean_cb = jnp.dot(
        gb, jnp.dot(gs, jnp.dot(y, sm, preferred_element_type=jnp.float32),
                    preferred_element_type=jnp.float32),
        preferred_element_type=jnp.float32)                        # (C_out, Bb)
    mean_full = jnp.dot(mean_cb, sb, preferred_element_type=jnp.float32)
    centered = y - mean_full
    var_cb = jnp.dot(
        gb, jnp.dot(gs, jnp.dot(centered * centered, sm,
                                preferred_element_type=jnp.float32),
                    preferred_element_type=jnp.float32),
        preferred_element_type=jnp.float32)                        # (C_out, Bb)
    scale_cb = gamma * jax.lax.rsqrt(var_cb + 1e-5)                # (C_out, Bb)
    scale_full = jnp.dot(scale_cb, sb, preferred_element_type=jnp.float32)
    yn = centered * scale_full + beta                # fused normalize + affine

    # ---- Mish: x * tanh(softplus(x)) = x * (u^2-1)/(u^2+1), u = 1 + exp(x) --
    t = jnp.minimum(yn, 20.0)     # tanh(softplus(x)) == 1.0 in f32 beyond this
    u = 1.0 + jnp.exp(t)
    u2 = u * u
    den = u2 + 1.0
    r = pl.reciprocal(den, approx=True)
    r = r * (2.0 - den * r)       # one Newton step -> f32 accuracy
    o_ref[...] = (yn * (u2 - 1.0) * r).astype(o_ref.dtype)


def conv1d_block(x, weight, bias, gamma, beta, *, n_groups, block_batch=None):
    """x: (B, C_in, T); weight: (C_out, C_in, K); bias/gamma/beta: (C_out,)."""
    B, C_in, T = x.shape
    C_out, _, K = weight.shape
    if C_out % n_groups != 0:
        raise ValueError("out_channels must be divisible by n_groups")
    pad = K // 2
    W = T + 2 * pad                 # per-batch padded window width
    T_out = W - K + 1               # valid conv outputs per batch (== T for odd K)
    cs = C_out // n_groups

    # Batch-block size: fold enough batches to make the lane axis dense.
    if block_batch is None:
        block_batch = 1
        for bb in range(1, B + 1):
            if B % bb != 0:
                continue
            if bb * W > 4096:
                break
            block_batch = bb
            if bb * W >= 512:
                break
    if B % block_batch != 0:
        raise ValueError("batch must be divisible by block_batch")
    n_blk = B // block_batch
    Lb = ((block_batch * W + 127) // 128) * 128   # lane-dense, unmasked stores

    # ---- Host-side layout: fold batch into the lane axis, cast to bf16 ------
    xp = jnp.pad(x.astype(jnp.float32), ((0, 0), (0, 0), (pad, pad)))  # (B,Cin,W)
    xp = xp.reshape(n_blk, block_batch, C_in, W).transpose(0, 2, 1, 3)
    xp = xp.reshape(n_blk, C_in, block_batch * W)
    xp = jnp.pad(xp, ((0, 0), (0, 0), (0, Lb - block_batch * W)))
    x_fold = xp.transpose(1, 0, 2).reshape(C_in, n_blk * Lb).astype(jnp.bfloat16)

    # Tap-major flattened weight; bf16 operands, f32 accumulate in-kernel.
    w_flat = jnp.transpose(weight.astype(jnp.float32),
                           (0, 2, 1)).reshape(C_out, K * C_in).astype(jnp.bfloat16)

    # bias/gamma/beta merged into a single per-channel parameter array.
    params = jnp.stack([bias, gamma, beta], axis=1).astype(jnp.float32)  # (C_out,3)

    # Group sum / broadcast matrices (tiny; applied to (C_out, Bb) stats only).
    gid = jnp.arange(C_out) // cs
    g_sum = (jnp.arange(n_groups)[:, None] == gid[None, :]).astype(jnp.float32) / cs
    g_bc = (gid[:, None] == jnp.arange(n_groups)[None, :]).astype(jnp.float32)

    # Per-block segment matrices: time-mean over valid columns / batch broadcast.
    cols = jnp.arange(Lb)
    col_b = cols // W
    valid = (cols % W < T_out) & (col_b < block_batch)
    onehot = (col_b[:, None] == jnp.arange(block_batch)[None, :]) & valid[:, None]
    seg_mean = onehot.astype(jnp.float32) / T_out                     # (Lb, Bb)
    seg_bc = (col_b[None, :] == jnp.arange(block_batch)[:, None]
              ).astype(jnp.float32)                                   # (Bb, Lb)

    kernel = functools.partial(_conv1d_block_kernel, k_taps=K, c_in=C_in)

    # Explicit VMEM budget (review: v7x is 64 MiB physical / 32 MiB scoped):
    # double-buffered x/out blocks + f32 intermediates, with headroom.
    est = (2 * C_in * Lb * 2 + 2 * C_out * Lb * x.dtype.itemsize
           + 12 * C_out * Lb * 4 + 4 * C_out * K * C_in * 2 + (1 << 20))
    vmem_limit = int(min(48 * 2**20, max(8 * 2**20, 2 * est)))

    out_fold = pl.pallas_call(
        kernel,
        out_shape=jax.ShapeDtypeStruct((C_out, n_blk * Lb), x.dtype),
        grid_spec=pltpu.PrefetchScalarGridSpec(
            num_scalar_prefetch=0,
            grid=(n_blk,),
            in_specs=[
                pl.BlockSpec((C_in, Lb), lambda b: (0, b)),
                # Invariant operands: constant block index (DMA'd once, reused).
                pl.BlockSpec((C_out, K * C_in), lambda b: (0, 0)),
                pl.BlockSpec((C_out, 3), lambda b: (0, 0)),
                pl.BlockSpec((n_groups, C_out), lambda b: (0, 0)),
                pl.BlockSpec((C_out, n_groups), lambda b: (0, 0)),
                pl.BlockSpec((Lb, block_batch), lambda b: (0, 0)),
                pl.BlockSpec((block_batch, Lb), lambda b: (0, 0)),
            ],
            out_specs=pl.BlockSpec((C_out, Lb), lambda b: (0, b)),
        ),
        compiler_params=pltpu.CompilerParams(
            dimension_semantics=("parallel",),
            vmem_limit_bytes=vmem_limit),
    )(x_fold, w_flat, params, g_sum, g_bc, seg_mean, seg_bc)

    # Unfold: (C_out, n_blk*Lb) -> (B, C_out, T_out), dropping pad/garbage cols.
    out = out_fold.reshape(C_out, n_blk, Lb)[:, :, :block_batch * W]
    out = out.reshape(C_out, n_blk, block_batch, W)[:, :, :, :T_out]
    out = out.reshape(C_out, B, T_out).transpose(1, 0, 2)
    return out


def _reference(x, weight, bias, gamma, beta, *, n_groups):
    """Pure-JAX reference matching PyTorch Conv1d+GroupNorm+Mish semantics."""
    K = weight.shape[-1]
    pad = K // 2
    y = jax.lax.conv_general_dilated(
        x, weight, window_strides=(1,), padding=[(pad, pad)],
        dimension_numbers=("NCH", "OIH", "NCH"))
    y = y + bias[None, :, None]
    B, C, T = y.shape
    yg = y.reshape(B, n_groups, -1)
    m = yg.mean(-1, keepdims=True)
    v = ((yg - m) ** 2).mean(-1, keepdims=True)
    yn = ((yg - m) / jnp.sqrt(v + 1e-5)).reshape(B, C, T)
    yn = yn * gamma[None, :, None] + beta[None, :, None]
    return yn * jnp.tanh(jax.nn.softplus(yn))


if __name__ == "__main__":
    # Shapes consistent with Conv1dBlock(inp_channels=4, out_channels=8,
    # kernel_size=3, n_groups=4) applied to x of shape (batch=4, 4, horizon=16).
    B, C_in, C_out, K, T, G = 4, 4, 8, 3, 16, 4

    key = jax.random.PRNGKey(0)
    kx, kw, kb = jax.random.split(key, 3)
    x = jax.random.normal(kx, (B, C_in, T), dtype=jnp.float32)
    weight = jax.random.normal(kw, (C_out, C_in, K), dtype=jnp.float32) * 0.3
    bias = jax.random.normal(kb, (C_out,), dtype=jnp.float32) * 0.1
    gamma = jnp.ones((C_out,), dtype=jnp.float32)   # PyTorch GroupNorm defaults
    beta = jnp.zeros((C_out,), dtype=jnp.float32)

    # block_batch=2 -> grid=(2,), exercising the folded batch-block index maps.
    out = conv1d_block(x, weight, bias, gamma, beta, n_groups=G, block_batch=2)
    out = jax.block_until_ready(out)
    assert out.shape == (B, C_out, T), out.shape

    # Tight check vs. a reference using the kernel's bf16-rounded operands
    # (isolates kernel correctness from the deliberate bf16 quantization).
    xq = x.astype(jnp.bfloat16).astype(jnp.float32)
    wq = weight.astype(jnp.bfloat16).astype(jnp.float32)
    ref_q = _reference(xq, wq, bias, gamma, beta, n_groups=G)
    err_q = float(jnp.max(jnp.abs(out - ref_q)))
    assert jnp.allclose(out, ref_q, atol=1e-3, rtol=1e-3), err_q

    # Loose check vs. the full-f32 PyTorch-semantics reference (bf16 matmul
    # operands are a deliberate perf choice; tolerance loosened accordingly).
    ref = _reference(x, weight, bias, gamma, beta, n_groups=G)
    err = float(jnp.max(jnp.abs(out - ref)))
    assert jnp.allclose(out, ref, atol=5e-2, rtol=5e-2), err

    print("KERNEL_OK")
</pallas_src>

<mosaic_0001>
module attributes {stable_mosaic.version = 11 : i64} {
  func.func @_conv1d_block_kernel(%arg0: i32, %arg1: memref<4x128xbf16, #tpu.memory_space<vmem>>, %arg2: memref<8x12xbf16, #tpu.memory_space<vmem>>, %arg3: memref<8x3xf32, #tpu.memory_space<vmem>>, %arg4: memref<4x8xf32, #tpu.memory_space<vmem>>, %arg5: memref<8x4xf32, #tpu.memory_space<vmem>>, %arg6: memref<128x2xf32, #tpu.memory_space<vmem>>, %arg7: memref<2x128xf32, #tpu.memory_space<vmem>>, %arg8: memref<8x128xf32, #tpu.memory_space<vmem>>) attributes {dimension_semantics = [#tpu.dimension_semantics<parallel>], iteration_bounds = array<i64: 2>, scalar_prefetch = 0 : i64, scratch_operands = 0 : i64, tpu.core_type = #tpu.core_type<tc>, window_params = [{transform_indices = @transform_0, window_bounds = array<i64: 4, 128>}, {pipeline_mode = #tpu.pipeline_mode<synchronous>, transform_indices = @transform_1, window_bounds = array<i64: 8, 12>}, {pipeline_mode = #tpu.pipeline_mode<synchronous>, transform_indices = @transform_2, window_bounds = array<i64: 8, 3>}, {pipeline_mode = #tpu.pipeline_mode<synchronous>, transform_indices = @transform_3, window_bounds = array<i64: 4, 8>}, {pipeline_mode = #tpu.pipeline_mode<synchronous>, transform_indices = @transform_4, window_bounds = array<i64: 8, 4>}, {pipeline_mode = #tpu.pipeline_mode<synchronous>, transform_indices = @transform_5, window_bounds = array<i64: 128, 2>}, {pipeline_mode = #tpu.pipeline_mode<synchronous>, transform_indices = @transform_6, window_bounds = array<i64: 2, 128>}, {transform_indices = @transform_7, window_bounds = array<i64: 8, 128>}]} {
    %c0 = arith.constant 0 : index
    %c0_0 = arith.constant 0 : index
    %0 = vector.load %arg1[%c0, %c0_0] : memref<4x128xbf16, #tpu.memory_space<vmem>>, vector<4x128xbf16>
    %c0_1 = arith.constant 0 : index
    %c0_2 = arith.constant 0 : index
    %1 = vector.load %arg2[%c0_1, %c0_2] : memref<8x12xbf16, #tpu.memory_space<vmem>>, vector<8x12xbf16>
    %2 = vector.extract_strided_slice %1 {offsets = [0, 0], sizes = [8, 4], strides = [1, 1]} : vector<8x12xbf16> to vector<8x4xbf16>
    %cst = arith.constant dense<0.000000e+00> : vector<8x128xf32>
    %3 = tpu.matmul %2, %0, %cst {dimension_numbers = #tpu.dot_dimension_numbers<[1], [0], [0], [1], [0, 0, 1, 1], [], []>} : vector<8x4xbf16>, vector<4x128xbf16>, vector<8x128xf32> -> vector<8x128xf32>
    %4 = vector.extract_strided_slice %1 {offsets = [0, 4], sizes = [8, 4], strides = [1, 1]} : vector<8x12xbf16> to vector<8x4xbf16>
    %cst_3 = arith.constant dense<0.000000e+00> : vector<8x128xf32>
    %5 = tpu.matmul %4, %0, %cst_3 {dimension_numbers = #tpu.dot_dimension_numbers<[1], [0], [0], [1], [0, 0, 1, 1], [], []>} : vector<8x4xbf16>, vector<4x128xbf16>, vector<8x128xf32> -> vector<8x128xf32>
    %6 = vector.extract_strided_slice %5 {offsets = [0, 1], sizes = [8, 127], strides = [1, 1]} : vector<8x128xf32> to vector<8x127xf32>
    %7 = vector.extract_strided_slice %5 {offsets = [0, 0], sizes = [8, 1], strides = [1, 1]} : vector<8x128xf32> to vector<8x1xf32>
    %8 = tpu.concatenate %6, %7 in 1 : vector<8x127xf32>, vector<8x1xf32> -> vector<8x128xf32>
    %9 = arith.addf %3, %8 : vector<8x128xf32>
    %10 = vector.extract_strided_slice %1 {offsets = [0, 8], sizes = [8, 4], strides = [1, 1]} : vector<8x12xbf16> to vector<8x4xbf16>
    %cst_4 = arith.constant dense<0.000000e+00> : vector<8x128xf32>
    %11 = tpu.matmul %10, %0, %cst_4 {dimension_numbers = #tpu.dot_dimension_numbers<[1], [0], [0], [1], [0, 0, 1, 1], [], []>} : vector<8x4xbf16>, vector<4x128xbf16>, vector<8x128xf32> -> vector<8x128xf32>
    %12 = vector.extract_strided_slice %11 {offsets = [0, 2], sizes = [8, 126], strides = [1, 1]} : vector<8x128xf32> to vector<8x126xf32>
    %13 = vector.extract_strided_slice %11 {offsets = [0, 0], sizes = [8, 2], strides = [1, 1]} : vector<8x128xf32> to vector<8x2xf32>
    %14 = tpu.concatenate %12, %13 in 1 : vector<8x126xf32>, vector<8x2xf32> -> vector<8x128xf32>
    %15 = arith.addf %9, %14 : vector<8x128xf32>
    %c0_5 = arith.constant 0 : index
    %c0_6 = arith.constant 0 : index
    %16 = vector.load %arg3[%c0_5, %c0_6] : memref<8x3xf32, #tpu.memory_space<vmem>>, vector<8x1xf32>
    %c0_7 = arith.constant 0 : index
    %c1 = arith.constant 1 : index
    %17 = vector.load %arg3[%c0_7, %c1] : memref<8x3xf32, #tpu.memory_space<vmem>>, vector<8x1xf32>
    %c0_8 = arith.constant 0 : index
    %c2 = arith.constant 2 : index
    %18 = vector.load %arg3[%c0_8, %c2] : memref<8x3xf32, #tpu.memory_space<vmem>>, vector<8x1xf32>
    %19 = vector.broadcast %16 : vector<8x1xf32> to vector<8x128xf32>
    %20 = arith.addf %15, %19 : vector<8x128xf32>
    %c0_9 = arith.constant 0 : index
    %c0_10 = arith.constant 0 : index
    %21 = vector.load %arg6[%c0_9, %c0_10] : memref<128x2xf32, #tpu.memory_space<vmem>>, vector<128x2xf32>
    %c0_11 = arith.constant 0 : index
    %c0_12 = arith.constant 0 : index
    %22 = vector.load %arg7[%c0_11, %c0_12] : memref<2x128xf32, #tpu.memory_space<vmem>>, vector<2x128xf32>
    %c0_13 = arith.constant 0 : index
    %c0_14 = arith.constant 0 : index
    %23 = vector.load %arg4[%c0_13, %c0_14] : memref<4x8xf32, #tpu.memory_space<vmem>>, vector<4x8xf32>
    %c0_15 = arith.constant 0 : index
    %c0_16 = arith.constant 0 : index
    %24 = vector.load %arg5[%c0_15, %c0_16] : memref<8x4xf32, #tpu.memory_space<vmem>>, vector<8x4xf32>
    %cst_17 = arith.constant dense<0.000000e+00> : vector<8x2xf32>
    %25 = tpu.matmul %20, %21, %cst_17 {dimension_numbers = #tpu.dot_dimension_numbers<[1], [0], [0], [1], [0, 0, 1, 1], [], []>} : vector<8x128xf32>, vector<128x2xf32>, vector<8x2xf32> -> vector<8x2xf32>
    %cst_18 = arith.constant dense<0.000000e+00> : vector<4x2xf32>
    %26 = tpu.matmul %23, %25, %cst_18 {dimension_numbers = #tpu.dot_dimension_numbers<[1], [0], [0], [1], [0, 0, 1, 1], [], []>} : vector<4x8xf32>, vector<8x2xf32>, vector<4x2xf32> -> vector<4x2xf32>
    %cst_19 = arith.constant dense<0.000000e+00> : vector<8x2xf32>
    %27 = tpu.matmul %24, %26, %cst_19 {dimension_numbers = #tpu.dot_dimension_numbers<[1], [0], [0], [1], [0, 0, 1, 1], [], []>} : vector<8x4xf32>, vector<4x2xf32>, vector<8x2xf32> -> vector<8x2xf32>
    %cst_20 = arith.constant dense<0.000000e+00> : vector<8x128xf32>
    %28 = tpu.matmul %27, %22, %cst_20 {dimension_numbers = #tpu.dot_dimension_numbers<[1], [0], [0], [1], [0, 0, 1, 1], [], []>} : vector<8x2xf32>, vector<2x128xf32>, vector<8x128xf32> -> vector<8x128xf32>
    %29 = arith.subf %20, %28 : vector<8x128xf32>
    %30 = arith.mulf %29, %29 : vector<8x128xf32>
    %cst_21 = arith.constant dense<0.000000e+00> : vector<8x2xf32>
    %31 = tpu.matmul %30, %21, %cst_21 {dimension_numbers = #tpu.dot_dimension_numbers<[1], [0], [0], [1], [0, 0, 1, 1], [], []>} : vector<8x128xf32>, vector<128x2xf32>, vector<8x2xf32> -> vector<8x2xf32>
    %cst_22 = arith.constant dense<0.000000e+00> : vector<4x2xf32>
    %32 = tpu.matmul %23, %31, %cst_22 {dimension_numbers = #tpu.dot_dimension_numbers<[1], [0], [0], [1], [0, 0, 1, 1], [], []>} : vector<4x8xf32>, vector<8x2xf32>, vector<4x2xf32> -> vector<4x2xf32>
    %cst_23 = arith.constant dense<0.000000e+00> : vector<8x2xf32>
    %33 = tpu.matmul %24, %32, %cst_23 {dimension_numbers = #tpu.dot_dimension_numbers<[1], [0], [0], [1], [0, 0, 1, 1], [], []>} : vector<8x4xf32>, vector<4x2xf32>, vector<8x2xf32> -> vector<8x2xf32>
    %cst_24 = arith.constant 9.99999974E-6 : f32
    %34 = vector.broadcast %cst_24 : f32 to vector<8x2xf32>
    %35 = arith.addf %33, %34 : vector<8x2xf32>
    %36 = math.rsqrt %35 : vector<8x2xf32>
    %37 = vector.broadcast %17 : vector<8x1xf32> to vector<8x2xf32>
    %38 = arith.mulf %37, %36 : vector<8x2xf32>
    %cst_25 = arith.constant dense<0.000000e+00> : vector<8x128xf32>
    %39 = tpu.matmul %38, %22, %cst_25 {dimension_numbers = #tpu.dot_dimension_numbers<[1], [0], [0], [1], [0, 0, 1, 1], [], []>} : vector<8x2xf32>, vector<2x128xf32>, vector<8x128xf32> -> vector<8x128xf32>
    %40 = arith.mulf %29, %39 : vector<8x128xf32>
    %41 = vector.broadcast %18 : vector<8x1xf32> to vector<8x128xf32>
    %42 = arith.addf %40, %41 : vector<8x128xf32>
    %cst_26 = arith.constant 2.000000e+01 : f32
    %43 = vector.broadcast %cst_26 : f32 to vector<8x128xf32>
    %44 = arith.minimumf %42, %43 : vector<8x128xf32>
    %45 = math.exp %44 : vector<8x128xf32>
    %cst_27 = arith.constant 1.000000e+00 : f32
    %46 = vector.broadcast %cst_27 : f32 to vector<8x128xf32>
    %47 = arith.addf %46, %45 : vector<8x128xf32>
    %48 = arith.mulf %47, %47 : vector<8x128xf32>
    %cst_28 = arith.constant 1.000000e+00 : f32
    %49 = vector.broadcast %cst_28 : f32 to vector<8x128xf32>
    %50 = arith.addf %48, %49 : vector<8x128xf32>
    %51 = tpu.reciprocal %50 {approx = true} : vector<8x128xf32> -> vector<8x128xf32>
    %52 = arith.mulf %50, %51 : vector<8x128xf32>
    %cst_29 = arith.constant 2.000000e+00 : f32
    %53 = vector.broadcast %cst_29 : f32 to vector<8x128xf32>
    %54 = arith.subf %53, %52 : vector<8x128xf32>
    %55 = arith.mulf %51, %54 : vector<8x128xf32>
    %cst_30 = arith.constant 1.000000e+00 : f32
    %56 = vector.broadcast %cst_30 : f32 to vector<8x128xf32>
    %57 = arith.subf %48, %56 : vector<8x128xf32>
    %58 = arith.mulf %42, %57 : vector<8x128xf32>
    %59 = arith.mulf %58, %55 : vector<8x128xf32>
    %c0_31 = arith.constant 0 : index
    %c0_32 = arith.constant 0 : index
    %60 = vector.load %arg8[%c0_31, %c0_32] : memref<8x128xf32, #tpu.memory_space<vmem>>, vector<8x128xf32>
    tpu.vector_store %arg8[%c0_31, %c0_32], %59 {strides = array<i32>} : memref<8x128xf32, #tpu.memory_space<vmem>>, vector<8x128xf32>,
    return
  }
  func.func @transform_0(%arg0: i32) -> (i32, i32) {
    %c0_i32 = arith.constant 0 : i32
    %c0_i32_0 = arith.constant 0 : i32
    return %c0_i32, %arg0 : i32, i32
  }
  func.func @transform_1(%arg0: i32) -> (i32, i32) {
    %c0_i32 = arith.constant 0 : i32
    %c0_i32_0 = arith.constant 0 : i32
    %c0_i32_1 = arith.constant 0 : i32
    return %c0_i32, %c0_i32_0 : i32, i32
  }
  func.func @transform_2(%arg0: i32) -> (i32, i32) {
    %c0_i32 = arith.constant 0 : i32
    %c0_i32_0 = arith.constant 0 : i32
    %c0_i32_1 = arith.constant 0 : i32
    return %c0_i32, %c0_i32_0 : i32, i32
  }
  func.func @transform_3(%arg0: i32) -> (i32, i32) {
    %c0_i32 = arith.constant 0 : i32
    %c0_i32_0 = arith.constant 0 : i32
    %c0_i32_1 = arith.constant 0 : i32
    return %c0_i32, %c0_i32_0 : i32, i32
  }
  func.func @transform_4(%arg0: i32) -> (i32, i32) {
    %c0_i32 = arith.constant 0 : i32
    %c0_i32_0 = arith.constant 0 : i32
    %c0_i32_1 = arith.constant 0 : i32
    return %c0_i32, %c0_i32_0 : i32, i32
  }
  func.func @transform_5(%arg0: i32) -> (i32, i32) {
    %c0_i32 = arith.constant 0 : i32
    %c0_i32_0 = arith.constant 0 : i32
    %c0_i32_1 = arith.constant 0 : i32
    return %c0_i32, %c0_i32_0 : i32, i32
  }
  func.func @transform_6(%arg0: i32) -> (i32, i32) {
    %c0_i32 = arith.constant 0 : i32
    %c0_i32_0 = arith.constant 0 : i32
    %c0_i32_1 = arith.constant 0 : i32
    return %c0_i32, %c0_i32_0 : i32, i32
  }
  func.func @transform_7(%arg0: i32) -> (i32, i32) {
    %c0_i32 = arith.constant 0 : i32
    %c0_i32_0 = arith.constant 0 : i32
    return %c0_i32, %arg0 : i32, i32
  }
}

</mosaic_0001>

<llo_original>
// kernel: tpu_custom_call.1
$region0: #{tpu_custom_call.1}
  #allocation0 [shape = 'u32[]', space=smem, size = 0x4, offset = 0x4, fixed_abs, tag = 'smem constant byte address 0x4 - core index']
  #allocation1 [shape = 'u32[144,128]{1,0:T(1,128)}', space=vmem, size = 0x12000, scoped, tag = 'internal scratch']
  %s0 = inlined_call_operand.vmem [shape: bf16[4,256], index: 0, kind: input, shape index: {}]
  %s1 = inlined_call_operand.vmem [shape: bf16[8,12], index: 1, kind: input, shape index: {}]
  %s2 = inlined_call_operand.vmem [shape: f32[8,3], index: 2, kind: input, shape index: {}]
  %s3 = inlined_call_operand.vmem [shape: f32[4,8], index: 3, kind: input, shape index: {}]
  %s4 = inlined_call_operand.vmem [shape: f32[8,4], index: 4, kind: input, shape index: {}]
  %s5 = inlined_call_operand.vmem [shape: f32[128,2], index: 5, kind: input, shape index: {}]
  %s6 = inlined_call_operand.vmem [shape: f32[2,128], index: 6, kind: input, shape index: {}]
  %s7 = inlined_call_operand.hbm [shape: f32[8,256], index: 7, kind: output, shape index: {}]
  %s8 = sld [smem:[#allocation0]]
  $region61: #{tpu_custom_call.1} parent=0
    _
  %s10 = ssub.s32 1, %s8
  %s11 = scalar_select 0, %s10, %s8
  $region1: #{tpu_custom_call.1} parent=0
    #allocation2 [shape = 'u8[8192]{0}', space=vmem, size = 0x2000, scoped, tag = 'output window, operand 0']
    #allocation3 [shape = 's32[2]{0}', space=sflag, size = 0x8, scoped, tag = 'scoped memory for tpu_custom_call.1']
    %12 = vsyncpa [#allocation3], 0
    %s13 = scalar_lea.sflag [#allocation3], 1
    %14 = vsyncpa %s13, 0
    loop: start=0, step=1, limit=4
    $region2: #{tpu_custom_call.1} parent=1 // loop_pre_header
      _
    $region3: #{tpu_custom_call.1} parent=1 // loop_header
      %s16 = sphi 0, %s20
      %p17 = scmp.ge.s32.totalorder %s16, 4
      %s26 = sphi 0, %s28
      %s29 = sphi 0, %s26
      %s30 = sphi 0, %s29
      %s46 = sphi 0, %s30
      %s50 = sphi 0, %s50
      %s52 = sphi 0, %s50
      %s53 = sphi 0, %s52
      %s67 = sphi 0, %s53
      %s71 = sphi 0, %s71
      %s73 = sphi 0, %s71
      %s74 = sphi 0, %s73
      %s88 = sphi 0, %s74
      %s92 = sphi 0, %s92
      %s94 = sphi 0, %s92
      %s95 = sphi 0, %s94
      %s109 = sphi 0, %s95
      %s113 = sphi 0, %s113
      %s115 = sphi 0, %s113
      %s116 = sphi 0, %s115
      %s130 = sphi 0, %s116
      %s134 = sphi 0, %s134
      %s136 = sphi 0, %s134
      %s137 = sphi 0, %s136
      %s151 = sphi 0, %s137
      %s155 = sphi 0, %s155
      %s157 = sphi 0, %s155
      %s158 = sphi 0, %s157
      %s172 = sphi 0, %s158
      %s178 = sphi 0, %s180
      %s181 = sphi 0, %s178
      %s182 = sphi 0, %s181
      %s198 = sphi 0, %s182
    $region4: #{tpu_custom_call.1} parent=1 // loop_header_branch
      %19 = sbr.rel (%p17) target = $region8
    $region5: #{tpu_custom_call.1} parent=1 // loop_body
      %s21 = ssub.s32 %s16, 1
      %s22 = ssub.s32 %s16, 2
      %s23 = sadd.s32 %s16, 1
      %s24 = ssub.s32 %s16, %s23
      %p25 = scmp.eq.s32.totalorder %s24, 0
      %s27 = sadd.s32 %s26, 1
      %s28 = scalar_select %p25, %s26, %s27
      %p31 = pneg %p25
      %p32 = scmp.eq.s32.totalorder %s16, 1
      %p33 = por %p31, %p32
      %p34 = scmp.ne.s32.totalorder %s26, %s29
      %p35 = scmp.eq.s32.totalorder %s16, 0
      %p36 = por %p34, %p35
      %p37 = scmp.ne.s32.totalorder %s26, %s29
      %p38 = scmp.eq.s32.totalorder %s21, 1
      %p39 = por %p37, %p38
      %p40 = scmp.ne.s32.totalorder %s29, %s30
      %p41 = scmp.eq.s32.totalorder %s21, 0
      %p42 = por %p40, %p41
      %p43 = scmp.ne.s32.totalorder %s29, %s30
      %p44 = scmp.eq.s32.totalorder %s22, 1
      %p45 = por %p43, %p44
      %p47 = scmp.ne.s32.totalorder %s30, %s46
      %p48 = scmp.eq.s32.totalorder %s22, 0
      %p49 = por %p47, %p48
      %s51 = sadd.s32 %s50, 1
      %p54 = scmp.eq.s32.totalorder %s16, 1
      %p55 = scmp.ne.s32.totalorder %s50, %s52
      %p56 = scmp.eq.s32.totalorder %s16, 0
      %p57 = por %p55, %p56
      %p58 = scmp.ne.s32.totalorder %s50, %s52
      %p59 = scmp.eq.s32.totalorder %s21, 1
      %p60 = por %p58, %p59
      %p61 = scmp.ne.s32.totalorder %s52, %s53
      %p62 = scmp.eq.s32.totalorder %s21, 0
      %p63 = por %p61, %p62
      %p64 = scmp.ne.s32.totalorder %s52, %s53
      %p65 = scmp.eq.s32.totalorder %s22, 1
      %p66 = por %p64, %p65
      %p68 = scmp.ne.s32.totalorder %s53, %s67
      %p69 = scmp.eq.s32.totalorder %s22, 0
      %p70 = por %p68, %p69
      %s72 = sadd.s32 %s71, 1
      %p75 = scmp.eq.s32.totalorder %s16, 1
      %p76 = scmp.ne.s32.totalorder %s71, %s73
      %p77 = scmp.eq.s32.totalorder %s16, 0
      %p78 = por %p76, %p77
      %p79 = scmp.ne.s32.totalorder %s71, %s73
      %p80 = scmp.eq.s32.totalorder %s21, 1
      %p81 = por %p79, %p80
      %p82 = scmp.ne.s32.totalorder %s73, %s74
      %p83 = scmp.eq.s32.totalorder %s21, 0
      %p84 = por %p82, %p83
      %p85 = scmp.ne.s32.totalorder %s73, %s74
      %p86 = scmp.eq.s32.totalorder %s22, 1
      %p87 = por %p85, %p86
      %p89 = scmp.ne.s32.totalorder %s74, %s88
      %p90 = scmp.eq.s32.totalorder %s22, 0
      %p91 = por %p89, %p90
      %s93 = sadd.s32 %s92, 1
      %p96 = scmp.eq.s32.totalorder %s16, 1
      %p97 = scmp.ne.s32.totalorder %s92, %s94
      %p98 = scmp.eq.s32.totalorder %s16, 0
      %p99 = por %p97, %p98
      %p100 = scmp.ne.s32.totalorder %s92, %s94
      %p101 = scmp.eq.s32.totalorder %s21, 1
      %p102 = por %p100, %p101
      %p103 = scmp.ne.s32.totalorder %s94, %s95
      %p104 = scmp.eq.s32.totalorder %s21, 0
      %p105 = por %p103, %p104
      %p106 = scmp.ne.s32.totalorder %s94, %s95
      %p107 = scmp.eq.s32.totalorder %s22, 1
      %p108 = por %p106, %p107
      %p110 = scmp.ne.s32.totalorder %s95, %s109
      %p111 = scmp.eq.s32.totalorder %s22, 0
      %p112 = por %p110, %p111
      %s114 = sadd.s32 %s113, 1
      %p117 = scmp.eq.s32.totalorder %s16, 1
      %p118 = scmp.ne.s32.totalorder %s113, %s115
      %p119 = scmp.eq.s32.totalorder %s16, 0
      %p120 = por %p118, %p119
      %p121 = scmp.ne.s32.totalorder %s113, %s115
      %p122 = scmp.eq.s32.totalorder %s21, 1
      %p123 = por %p121, %p122
      %p124 = scmp.ne.s32.totalorder %s115, %s116
      %p125 = scmp.eq.s32.totalorder %s21, 0
      %p126 = por %p124, %p125
      %p127 = scmp.ne.s32.totalorder %s115, %s116
      %p128 = scmp.eq.s32.totalorder %s22, 1
      %p129 = por %p127, %p128
      %p131 = scmp.ne.s32.totalorder %s116, %s130
      %p132 = scmp.eq.s32.totalorder %s22, 0
      %p133 = por %p131, %p132
      %s135 = sadd.s32 %s134, 1
      %p138 = scmp.eq.s32.totalorder %s16, 1
      %p139 = scmp.ne.s32.totalorder %s134, %s136
      %p140 = scmp.eq.s32.totalorder %s16, 0
      %p141 = por %p139, %p140
      %p142 = scmp.ne.s32.totalorder %s134, %s136
      %p143 = scmp.eq.s32.totalorder %s21, 1
      %p144 = por %p142, %p143
      %p145 = scmp.ne.s32.totalorder %s136, %s137
      %p146 = scmp.eq.s32.totalorder %s21, 0
      %p147 = por %p145, %p146
      %p148 = scmp.ne.s32.totalorder %s136, %s137
      %p149 = scmp.eq.s32.totalorder %s22, 1
      %p150 = por %p148, %p149
      %p152 = scmp.ne.s32.totalorder %s137, %s151
      %p153 = scmp.eq.s32.totalorder %s22, 0
      %p154 = por %p152, %p153
      %s156 = sadd.s32 %s155, 1
      %p159 = scmp.eq.s32.totalorder %s16, 1
      %p160 = scmp.ne.s32.totalorder %s155, %s157
      %p161 = scmp.eq.s32.totalorder %s16, 0
      %p162 = por %p160, %p161
      %p163 = scmp.ne.s32.totalorder %s155, %s157
      %p164 = scmp.eq.s32.totalorder %s21, 1
      %p165 = por %p163, %p164
      %p166 = scmp.ne.s32.totalorder %s157, %s158
      %p167 = scmp.eq.s32.totalorder %s21, 0
      %p168 = por %p166, %p167
      %p169 = scmp.ne.s32.totalorder %s157, %s158
      %p170 = scmp.eq.s32.totalorder %s22, 1
      %p171 = por %p169, %p170
      %p173 = scmp.ne.s32.totalorder %s158, %s172
      %p174 = scmp.eq.s32.totalorder %s22, 0
      %p175 = por %p173, %p174
      %s176 = ssub.s32 %s16, %s23
      %p177 = scmp.eq.s32.totalorder %s176, 0
      %s179 = sadd.s32 %s178, 1
      %s180 = scalar_select %p177, %s178, %s179
      %p183 = pneg %p177
      %p184 = scmp.eq.s32.totalorder %s16, 1
      %p185 = por %p183, %p184
      %p186 = scmp.ne.s32.totalorder %s178, %s181
      %p187 = scmp.eq.s32.totalorder %s16, 0
      %p188 = por %p186, %p187
      %p189 = scmp.ne.s32.totalorder %s178, %s181
      %p190 = scmp.eq.s32.totalorder %s21, 1
      %p191 = por %p189, %p190
      %p192 = scmp.ne.s32.totalorder %s181, %s182
      %p193 = scmp.eq.s32.totalorder %s21, 0
      %p194 = por %p192, %p193
      %p195 = scmp.ne.s32.totalorder %s181, %s182
      %p196 = scmp.eq.s32.totalorder %s22, 1
      %p197 = por %p195, %p196
      %p199 = scmp.ne.s32.totalorder %s182, %s198
      %p200 = scmp.eq.s32.totalorder %s22, 0
      %p201 = por %p199, %p200
      %p202 = scmp.le.s32.totalorder 1, %s16
      %p203 = scmp.lt.s32.totalorder %s16, 3
      %p204 = pnand %p202, %p203
      %p205 = pneg %p204
      // Predicated region
      $region9: #{tpu_custom_call.1} parent=5 // pred_check
        _
      $region10: #{tpu_custom_call.1} parent=5 // pred_check_branch
        %207 = sbr.rel (%p204) target = $region12
      $region11: #{tpu_custom_call.1} parent=5 // pred_region
        %s208 = ssub.s32 %s16, 1
        // Predicated region
        $region13: #{tpu_custom_call.1} parent=11 // pred_check
          %p209 = pneg %p63
        $region14: #{tpu_custom_call.1} parent=11 // pred_check_branch
          %211 = sbr.rel (%p209) target = $region16
        $region15: #{tpu_custom_call.1} parent=11 // pred_region
          _
        $region16: #{tpu_custom_call.1} parent=11 // pred_fallthru
          _
        // Predicated region
        $region17: #{tpu_custom_call.1} parent=11 // pred_check
          %p212 = pneg %p84
        $region18: #{tpu_custom_call.1} parent=11 // pred_check_branch
          %214 = sbr.rel (%p212) target = $region20
        $region19: #{tpu_custom_call.1} parent=11 // pred_region
          _
        $region20: #{tpu_custom_call.1} parent=11 // pred_fallthru
          _
        // Predicated region
        $region21: #{tpu_custom_call.1} parent=11 // pred_check
          %p215 = pneg %p105
        $region22: #{tpu_custom_call.1} parent=11 // pred_check_branch
          %217 = sbr.rel (%p215) target = $region24
        $region23: #{tpu_custom_call.1} parent=11 // pred_region
          _
        $region24: #{tpu_custom_call.1} parent=11 // pred_fallthru
          _
        // Predicated region
        $region25: #{tpu_custom_call.1} parent=11 // pred_check
          %p218 = pneg %p126
        $region26: #{tpu_custom_call.1} parent=11 // pred_check_branch
          %220 = sbr.rel (%p218) target = $region28
        $region27: #{tpu_custom_call.1} parent=11 // pred_region
          _
        $region28: #{tpu_custom_call.1} parent=11 // pred_fallthru
          _
        // Predicated region
        $region29: #{tpu_custom_call.1} parent=11 // pred_check
          %p221 = pneg %p147
        $region30: #{tpu_custom_call.1} parent=11 // pred_check_branch
          %223 = sbr.rel (%p221) target = $region32
        $region31: #{tpu_custom_call.1} parent=11 // pred_region
          _
        $region32: #{tpu_custom_call.1} parent=11 // pred_fallthru
          _
        // Predicated region
        $region33: #{tpu_custom_call.1} parent=11 // pred_check
          %p224 = pneg %p168
        $region34: #{tpu_custom_call.1} parent=11 // pred_check_branch
          %226 = sbr.rel (%p224) target = $region36
        $region35: #{tpu_custom_call.1} parent=11 // pred_region
          _
        $region36: #{tpu_custom_call.1} parent=11 // pred_fallthru
          _
      $region12: #{tpu_custom_call.1} parent=5 // pred_fallthru
        _
      %p227 = scmp.lt.s32.totalorder %s16, 2
      // Predicated region
      $region37: #{tpu_custom_call.1} parent=5 // pred_check
        %p228 = pneg %p227
      $region38: #{tpu_custom_call.1} parent=5 // pred_check_branch
        %230 = sbr.rel (%p228) target = $region40
      $region39: #{tpu_custom_call.1} parent=5 // pred_region
        // Predicated region
        $region41: #{tpu_custom_call.1} parent=39 // pred_check
          %p231 = pneg %p36
        $region42: #{tpu_custom_call.1} parent=39 // pred_check_branch
          %233 = sbr.rel (%p231) target = $region44
        $region43: #{tpu_custom_call.1} parent=39 // pred_region
          %p234 = scmp.lt.s32.totalorder %s16, 1
          %s235 = scalar_select %p234, %s16, 1
          %s236 = smul.addr %s235, 2
          %s237 = scalar_lea.vmem %s0, %s236
        $region44: #{tpu_custom_call.1} parent=39 // pred_fallthru
          _
      $region40: #{tpu_custom_call.1} parent=5 // pred_fallthru
        _
      %p238 = scmp.le.s32.totalorder 1, %s16
      %p239 = scmp.lt.s32.totalorder %s16, 3
      %p240 = pnand %p238, %p239
      %p241 = pneg %p240
      // Predicated region
      $region45: #{tpu_custom_call.1} parent=5 // pred_check
        _
      $region46: #{tpu_custom_call.1} parent=5 // pred_check_branch
        %243 = sbr.rel (%p240) target = $region48
      $region47: #{tpu_custom_call.1} parent=5 // pred_region
        %s244 = ssub.s32 %s16, 1
        %p245 = scmp.lt.s32.totalorder %s21, 1
        %s246 = scalar_select %p245, %s21, 1
        %s247 = smul.addr %s246, 2
        %s248 = scalar_lea.vmem %s0, %s247
        %p249 = pneg %p42
        %p250 = pneg %p39
        %p251 = pneg %p63
        %p252 = pneg %p60
        %p253 = pneg %p84
        %p254 = pneg %p81
        %p255 = pneg %p105
        %p256 = pneg %p102
        %p257 = pneg %p126
        %p258 = pneg %p123
        %p259 = pneg %p147
        %p260 = pneg %p144
        %p261 = pneg %p168
        %p262 = pneg %p165
        %p263 = pneg %p194
        %p264 = pneg %p191
        %s265 = sand.u32 %s181, 1
        %s266 = scalar_lea.sflag [#allocation3], %s265
        %s267 = sand.u32 %s181, 1
        %s268 = smul.addr %s267, 8
        %s269 = scalar_lea.vmem [#allocation2], %s268
        %p270 = scmp.lt.s32.totalorder %s21, 1
        %s271 = scalar_select %p270, %s21, 1
        %s272 = smul.addr %s271, 2
        %s273 = scalar_lea.vmem %s0, %s272
        %v275 = vld [vmem:[%s273] sm:$0x3]
        %v276 = vld [vmem:[%s1] sm:$0xf]
        %v278 = vunpack.c.l.b16 %v276
        %v279 = vpack.c.b16 %v278, %v278
        %280 = vrot.lane.b32.xlu0 %v279, 124
        %v281 = vpop.permute.xlu0 %280
        %vm282 = vcmask 31744
        %v284 = vsel %vm282, %v281, 0
        %vm286 = vcmask 1041408
        %v288 = vsel %vm286, %v275, 0
        %290 = vmatprep.subr.bf16.mxu0 0
        %291 = vmatpush1.bf16.msra.mxu0 0
        %292 = vmatprep.subr.bf16.mxu0 0
        %293 = vmatpush1.bf16.msra.mxu0 0
        %294 = vmatprep.subr.bf16.mxu0 0
        %295 = vmatpush1.bf16.msra.mxu0 0
        %296 = vmatprep.subr.bf16.mxu0 0
        %297 = vmatpush1.bf16.msra.mxu0 0
        %298 = vmatprep.subr.bf16.mxu0 0
        %299 = vmatpush1.bf16.msra.mxu0 0
        %300 = vmatprep.subr.bf16.mxu0 0
        %301 = vmatpush1.bf16.msra.mxu0 0
        %302 = vmatprep.subr.bf16.mxu0 0
        %303 = vmatpush1.bf16.msra.mxu0 0
        %304 = vmatprep.subr.bf16.mxu0 0
        %305 = vmatpush1.bf16.msra.mxu0 %v288
        %306 = vmatprep.subr.bf16.mxu0 0
        %307 = vmatpush2.bf16.msra.mxu0 0
        %308 = vmatprep.subr.bf16.mxu0 0
        %309 = vmatpush2.bf16.msra.mxu0 0
        %310 = vmatprep.subr.bf16.mxu0 0
        %311 = vmatpush2.bf16.msra.mxu0 0
        %312 = vmatprep.subr.bf16.mxu0 0
        %313 = vmatpush2.bf16.msra.mxu0 0
        %314 = vmatprep.subr.bf16.mxu0 0
        %315 = vmatpush2.bf16.msra.mxu0 0
        %316 = vmatprep.subr.bf16.mxu0 0
        %317 = vmatpush2.bf16.msra.mxu0 0
        %318 = vmatprep.subr.bf16.mxu0 0
        %319 = vmatpush2.bf16.msra.mxu0 0
        %320 = vmatprep.subr.bf16.mxu0 0
        %321 = vmatpush2.bf16.msra.mxu0 0
        %322 = vmatprep.mubr.bf16.mxu0 0
        %323 = vmatmul.mubr.bf16.gmra.mxu0 %v284
        %v324 = vpop.f32.mrf.mxu0
        %v325 = vadd.f32 0.0, %v324
        %v326 = vpop.f32.mrf.mxu0
        %v327 = vpop.f32.mrf.mxu0
        %v328 = vpop.f32.mrf.mxu0
        %329 = vdwg.mxu0
        %331 = vrot.lane.b32.xlu0 %v325, 127
        %v332 = vpop.permute.xlu0 %331
        %v335 = vsel %vm282, %v276, 0
        %337 = vmatprep.subr.bf16.mxu0 0
        %338 = vmatpush1.bf16.msra.mxu0 0
        %339 = vmatprep.subr.bf16.mxu0 0
        %340 = vmatpush1.bf16.msra.mxu0 0
        %341 = vmatprep.subr.bf16.mxu0 0
        %342 = vmatpush1.bf16.msra.mxu0 0
        %343 = vmatprep.subr.bf16.mxu0 0
        %344 = vmatpush1.bf16.msra.mxu0 0
        %345 = vmatprep.subr.bf16.mxu0 0
        %346 = vmatpush1.bf16.msra.mxu0 0
        %347 = vmatprep.subr.bf16.mxu0 0
        %348 = vmatpush1.bf16.msra.mxu0 0
        %349 = vmatprep.subr.bf16.mxu0 0
        %350 = vmatpush1.bf16.msra.mxu0 0
        %351 = vmatprep.subr.bf16.mxu0 0
        %352 = vmatpush1.bf16.msra.mxu0 %v288
        %353 = vmatprep.subr.bf16.mxu0 0
        %354 = vmatpush2.bf16.msra.mxu0 0
        %355 = vmatprep.subr.bf16.mxu0 0
        %356 = vmatpush2.bf16.msra.mxu0 0
        %357 = vmatprep.subr.bf16.mxu0 0
        %358 = vmatpush2.bf16.msra.mxu0 0
        %359 = vmatprep.subr.bf16.mxu0 0
        %360 = vmatpush2.bf16.msra.mxu0 0
        %361 = vmatprep.subr.bf16.mxu0 0
        %362 = vmatpush2.bf16.msra.mxu0 0
        %363 = vmatprep.subr.bf16.mxu0 0
        %364 = vmatpush2.bf16.msra.mxu0 0
        %365 = vmatprep.subr.bf16.mxu0 0
        %366 = vmatpush2.bf16.msra.mxu0 0
        %367 = vmatprep.subr.bf16.mxu0 0
        %368 = vmatpush2.bf16.msra.mxu0 0
        %369 = vmatprep.mubr.bf16.mxu0 0
        %370 = vmatmul.mubr.bf16.gmra.mxu0 %v335
        %v371 = vpop.f32.mrf.mxu0
        %v372 = vadd.f32 %v332, %v371
        %v373 = vpop.f32.mrf.mxu0
        %v374 = vpop.f32.mrf.mxu0
        %v375 = vpop.f32.mrf.mxu0
        %376 = vdwg.mxu0
        %377 = vrot.lane.b32.xlu0 %v279, 120
        %v378 = vpop.permute.xlu0 %377
        %v380 = vsel %vm282, %v378, 0
        %382 = vmatprep.subr.bf16.mxu0 0
        %383 = vmatpush1.bf16.msra.mxu0 0
        %384 = vmatprep.subr.bf16.mxu0 0
        %385 = vmatpush1.bf16.msra.mxu0 0
        %386 = vmatprep.subr.bf16.mxu0 0
        %387 = vmatpush1.bf16.msra.mxu0 0
        %388 = vmatprep.subr.bf16.mxu0 0
        %389 = vmatpush1.bf16.msra.mxu0 0
        %390 = vmatprep.subr.bf16.mxu0 0
        %391 = vmatpush1.bf16.msra.mxu0 0
        %392 = vmatprep.subr.bf16.mxu0 0
        %393 = vmatpush1.bf16.msra.mxu0 0
        %394 = vmatprep.subr.bf16.mxu0 0
        %395 = vmatpush1.bf16.msra.mxu0 0
        %396 = vmatprep.subr.bf16.mxu0 0
        %397 = vmatpush1.bf16.msra.mxu0 %v288
        %398 = vmatprep.subr.bf16.mxu0 0
        %399 = vmatpush2.bf16.msra.mxu0 0
        %400 = vmatprep.subr.bf16.mxu0 0
        %401 = vmatpush2.bf16.msra.mxu0 0
        %402 = vmatprep.subr.bf16.mxu0 0
        %403 = vmatpush2.bf16.msra.mxu0 0
        %404 = vmatprep.subr.bf16.mxu0 0
        %405 = vmatpush2.bf16.msra.mxu0 0
        %406 = vmatprep.subr.bf16.mxu0 0
        %407 = vmatpush2.bf16.msra.mxu0 0
        %408 = vmatprep.subr.bf16.mxu0 0
        %409 = vmatpush2.bf16.msra.mxu0 0
        %410 = vmatprep.subr.bf16.mxu0 0
        %411 = vmatpush2.bf16.msra.mxu0 0
        %412 = vmatprep.subr.bf16.mxu0 0
        %413 = vmatpush2.bf16.msra.mxu0 0
        %414 = vmatprep.mubr.bf16.mxu0 0
        %415 = vmatmul.mubr.bf16.gmra.mxu0 %v380
        %v416 = vpop.f32.mrf.mxu0
        %v417 = vadd.f32 0.0, %v416
        %v418 = vpop.f32.mrf.mxu0
        %v419 = vpop.f32.mrf.mxu0
        %v420 = vpop.f32.mrf.mxu0
        %421 = vdwg.mxu0
        %423 = vrot.lane.b32.xlu0 %v417, 126
        %v424 = vpop.permute.xlu0 %423
        %v426 = vadd.f32 %v372, %v424
        %v427 = vld [vmem:[%s2] sm:$0xff]
        %429 = vset.pattern.permute.xlu0 0
        %430 = vperm.xlu0 %429, %v427
        %v431 = vpop.permute.xlu0 %430
        %v433 = vadd.f32 %v426, %v431
        %v434 = vld [vmem:[%s5] sm:$0xff]
        %v435 = vld [vmem:[%s5 + $0x8] sm:$0xff]
        %v436 = vld [vmem:[%s5 + $0x10] sm:$0xff]
        %v437 = vld [vmem:[%s5 + $0x18] sm:$0xff]
        %v438 = vld [vmem:[%s5 + $0x20] sm:$0xff]
        %v439 = vld [vmem:[%s5 + $0x28] sm:$0xff]
        %v440 = vld [vmem:[%s5 + $0x30] sm:$0xff]
        %v441 = vld [vmem:[%s5 + $0x38] sm:$0xff]
        %v442 = vld [vmem:[%s5 + $0x40] sm:$0xff]
        %v443 = vld [vmem:[%s5 + $0x48] sm:$0xff]
        %v444 = vld [vmem:[%s5 + $0x50] sm:$0xff]
        %v445 = vld [vmem:[%s5 + $0x58] sm:$0xff]
        %v446 = vld [vmem:[%s5 + $0x60] sm:$0xff]
        %v447 = vld [vmem:[%s5 + $0x68] sm:$0xff]
        %v448 = vld [vmem:[%s5 + $0x70] sm:$0xff]
        %v449 = vld [vmem:[%s5 + $0x78] sm:$0xff]
        %v450 = vld [vmem:[%s6] sm:$0x3]
        %v451 = vld [vmem:[%s3] sm:$0xf]
        %v452 = vld [vmem:[%s4] sm:$0xff]
        %453 = vmatprep.subr.mxu0 0.0
        %454 = vmatpush1.msra.mxu0 %v449
        %455 = vmatprep.subr.mxu0 0.0
        %456 = vmatpush1.msra.mxu0 %v448
        %457 = vmatprep.subr.mxu0 0.0
        %458 = vmatpush1.msra.mxu0 %v447
        %459 = vmatprep.subr.mxu0 0.0
        %460 = vmatpush1.msra.mxu0 %v446
        %461 = vmatprep.subr.mxu0 0.0
        %462 = vmatpush1.msra.mxu0 %v445
        %463 = vmatprep.subr.mxu0 0.0
        %464 = vmatpush1.msra.mxu0 %v444
        %465 = vmatprep.subr.mxu0 0.0
        %466 = vmatpush1.msra.mxu0 %v443
        %467 = vmatprep.subr.mxu0 0.0
        %468 = vmatpush1.msra.mxu0 %v442
        %469 = vmatprep.subr.mxu0 0.0
        %470 = vmatpush1.msra.mxu0 %v441
        %471 = vmatprep.subr.mxu0 0.0
        %472 = vmatpush1.msra.mxu0 %v440
        %473 = vmatprep.subr.mxu0 0.0
        %474 = vmatpush1.msra.mxu0 %v439
        %475 = vmatprep.subr.mxu0 0.0
        %476 = vmatpush1.msra.mxu0 %v438
        %477 = vmatprep.subr.mxu0 0.0
        %478 = vmatpush1.msra.mxu0 %v437
        %479 = vmatprep.subr.mxu0 0.0
        %480 = vmatpush1.msra.mxu0 %v436
        %481 = vmatprep.subr.mxu0 0.0
        %482 = vmatpush1.msra.mxu0 %v435
        %483 = vmatprep.subr.mxu0 0.0
        %484 = vmatpush1.msra.mxu0 %v434
        %485 = vmatprep.subr.mxu0 0.0
        %486 = vmatpush2.msra.mxu0 0.0
        %487 = vmatprep.subr.mxu0 0.0
        %488 = vmatpush2.msra.mxu0 0.0
        %489 = vmatprep.subr.mxu0 0.0
        %490 = vmatpush2.msra.mxu0 0.0
        %491 = vmatprep.subr.mxu0 0.0
        %492 = vmatpush2.msra.mxu0 0.0
        %493 = vmatprep.subr.mxu0 0.0
        %494 = vmatpush2.msra.mxu0 0.0
        %495 = vmatprep.subr.mxu0 0.0
        %496 = vmatpush2.msra.mxu0 0.0
        %497 = vmatprep.subr.mxu0 0.0
        %498 = vmatpush2.msra.mxu0 0.0
        %499 = vmatprep.subr.mxu0 0.0
        %500 = vmatpush2.msra.mxu0 0.0
        %501 = vmatprep.subr.mxu0 0.0
        %502 = vmatpush2.msra.mxu0 0.0
        %503 = vmatprep.subr.mxu0 0.0
        %504 = vmatpush2.msra.mxu0 0.0
        %505 = vmatprep.subr.mxu0 0.0
        %506 = vmatpush2.msra.mxu0 0.0
        %507 = vmatprep.subr.mxu0 0.0
        %508 = vmatpush2.msra.mxu0 0.0
        %509 = vmatprep.subr.mxu0 0.0
        %510 = vmatpush2.msra.mxu0 0.0
        %511 = vmatprep.subr.mxu0 0.0
        %512 = vmatpush2.msra.mxu0 0.0
        %513 = vmatprep.subr.mxu0 0.0
        %514 = vmatpush2.msra.mxu0 0.0
        %515 = vmatprep.subr.mxu0 0.0
        %516 = vmatpush2.msra.mxu0 0.0
        %517 = vmatprep.mubr.f32.mxu0 0.0
        %518 = vmatmul.mubr.f32.gmra.mxu0 %v433
        %v519 = vpop.f32.mrf.mxu0
        %v520 = vadd.f32 0.0, %v519
        %v521 = vpop.f32.mrf.mxu0
        %522 = vdwg.mxu0
        %vm523 = vcmask 64512
        %v525 = vsel %vm523, %v451, 0
        %527 = vmatprep.subr.mxu0 0.0
        %528 = vmatpush1.msra.mxu0 0.0
        %529 = vmatprep.subr.mxu0 0.0
        %530 = vmatpush1.msra.mxu0 0.0
        %531 = vmatprep.subr.mxu0 0.0
        %532 = vmatpush1.msra.mxu0 0.0
        %533 = vmatprep.subr.mxu0 0.0
        %534 = vmatpush1.msra.mxu0 0.0
        %535 = vmatprep.subr.mxu0 0.0
        %536 = vmatpush1.msra.mxu0 0.0
        %537 = vmatprep.subr.mxu0 0.0
        %538 = vmatpush1.msra.mxu0 0.0
        %539 = vmatprep.subr.mxu0 0.0
        %540 = vmatpush1.msra.mxu0 0.0
        %541 = vmatprep.subr.mxu0 0.0
        %542 = vmatpush1.msra.mxu0 0.0
        %543 = vmatprep.subr.mxu0 0.0
        %544 = vmatpush1.msra.mxu0 0.0
        %545 = vmatprep.subr.mxu0 0.0
        %546 = vmatpush1.msra.mxu0 0.0
        %547 = vmatprep.subr.mxu0 0.0
        %548 = vmatpush1.msra.mxu0 0.0
        %549 = vmatprep.subr.mxu0 0.0
        %550 = vmatpush1.msra.mxu0 0.0
        %551 = vmatprep.subr.mxu0 0.0
        %552 = vmatpush1.msra.mxu0 0.0
        %553 = vmatprep.subr.mxu0 0.0
        %554 = vmatpush1.msra.mxu0 0.0
        %555 = vmatprep.subr.mxu0 0.0
        %556 = vmatpush1.msra.mxu0 0.0
        %557 = vmatprep.subr.mxu0 0.0
        %558 = vmatpush1.msra.mxu0 %v520
        %559 = vmatprep.subr.mxu0 0.0
        %560 = vmatpush2.msra.mxu0 0.0
        %561 = vmatprep.subr.mxu0 0.0
        %562 = vmatpush2.msra.mxu0 0.0
        %563 = vmatprep.subr.mxu0 0.0
        %564 = vmatpush2.msra.mxu0 0.0
        %565 = vmatprep.subr.mxu0 0.0
        %566 = vmatpush2.msra.mxu0 0.0
        %567 = vmatprep.subr.mxu0 0.0
        %568 = vmatpush2.msra.mxu0 0.0
        %569 = vmatprep.subr.mxu0 0.0
        %570 = vmatpush2.msra.mxu0 0.0
        %571 = vmatprep.subr.mxu0 0.0
        %572 = vmatpush2.msra.mxu0 0.0
        %573 = vmatprep.subr.mxu0 0.0
        %574 = vmatpush2.msra.mxu0 0.0
        %575 = vmatprep.subr.mxu0 0.0
        %576 = vmatpush2.msra.mxu0 0.0
        %577 = vmatprep.subr.mxu0 0.0
        %578 = vmatpush2.msra.mxu0 0.0
        %579 = vmatprep.subr.mxu0 0.0
        %580 = vmatpush2.msra.mxu0 0.0
        %581 = vmatprep.subr.mxu0 0.0
        %582 = vmatpush2.msra.mxu0 0.0
        %583 = vmatprep.subr.mxu0 0.0
        %584 = vmatpush2.msra.mxu0 0.0
        %585 = vmatprep.subr.mxu0 0.0
        %586 = vmatpush2.msra.mxu0 0.0
        %587 = vmatprep.subr.mxu0 0.0
        %588 = vmatpush2.msra.mxu0 0.0
        %589 = vmatprep.subr.mxu0 0.0
        %590 = vmatpush2.msra.mxu0 0.0
        %591 = vmatprep.mubr.f32.mxu0 0.0
        %592 = vmatmul.mubr.f32.gmra.mxu0 %v525
        %v593 = vpop.f32.mrf.mxu0
        %v594 = vadd.f32 0.0, %v593
        %v595 = vpop.f32.mrf.mxu0
        %596 = vdwg.mxu0
        %v598 = vsel %vm282, %v452, 0
        %vm600 = vcmask 1043456
        %v602 = vsel %vm600, %v594, 0
        %604 = vmatprep.subr.mxu0 0.0
        %605 = vmatpush1.msra.mxu0 0.0
        %606 = vmatprep.subr.mxu0 0.0
        %607 = vmatpush1.msra.mxu0 0.0
        %608 = vmatprep.subr.mxu0 0.0
        %609 = vmatpush1.msra.mxu0 0.0
        %610 = vmatprep.subr.mxu0 0.0
        %611 = vmatpush1.msra.mxu0 0.0
        %612 = vmatprep.subr.mxu0 0.0
        %613 = vmatpush1.msra.mxu0 0.0
        %614 = vmatprep.subr.mxu0 0.0
        %615 = vmatpush1.msra.mxu0 0.0
        %616 = vmatprep.subr.mxu0 0.0
        %617 = vmatpush1.msra.mxu0 0.0
        %618 = vmatprep.subr.mxu0 0.0
        %619 = vmatpush1.msra.mxu0 0.0
        %620 = vmatprep.subr.mxu0 0.0
        %621 = vmatpush1.msra.mxu0 0.0
        %622 = vmatprep.subr.mxu0 0.0
        %623 = vmatpush1.msra.mxu0 0.0
        %624 = vmatprep.subr.mxu0 0.0
        %625 = vmatpush1.msra.mxu0 0.0
        %626 = vmatprep.subr.mxu0 0.0
        %627 = vmatpush1.msra.mxu0 0.0
        %628 = vmatprep.subr.mxu0 0.0
        %629 = vmatpush1.msra.mxu0 0.0
        %630 = vmatprep.subr.mxu0 0.0
        %631 = vmatpush1.msra.mxu0 0.0
        %632 = vmatprep.subr.mxu0 0.0
        %633 = vmatpush1.msra.mxu0 0.0
        %634 = vmatprep.subr.mxu0 0.0
        %635 = vmatpush1.msra.mxu0 %v602
        %636 = vmatprep.subr.mxu0 0.0
        %637 = vmatpush2.msra.mxu0 0.0
        %638 = vmatprep.subr.mxu0 0.0
        %639 = vmatpush2.msra.mxu0 0.0
        %640 = vmatprep.subr.mxu0 0.0
        %641 = vmatpush2.msra.mxu0 0.0
        %642 = vmatprep.subr.mxu0 0.0
        %643 = vmatpush2.msra.mxu0 0.0
        %644 = vmatprep.subr.mxu0 0.0
        %645 = vmatpush2.msra.mxu0 0.0
        %646 = vmatprep.subr.mxu0 0.0
        %647 = vmatpush2.msra.mxu0 0.0
        %648 = vmatprep.subr.mxu0 0.0
        %649 = vmatpush2.msra.mxu0 0.0
        %650 = vmatprep.subr.mxu0 0.0
        %651 = vmatpush2.msra.mxu0 0.0
        %652 = vmatprep.subr.mxu0 0.0
        %653 = vmatpush2.msra.mxu0 0.0
        %654 = vmatprep.subr.mxu0 0.0
        %655 = vmatpush2.msra.mxu0 0.0
        %656 = vmatprep.subr.mxu0 0.0
        %657 = vmatpush2.msra.mxu0 0.0
        %658 = vmatprep.subr.mxu0 0.0
        %659 = vmatpush2.msra.mxu0 0.0
        %660 = vmatprep.subr.mxu0 0.0
        %661 = vmatpush2.msra.mxu0 0.0
        %662 = vmatprep.subr.mxu0 0.0
        %663 = vmatpush2.msra.mxu0 0.0
        %664 = vmatprep.subr.mxu0 0.0
        %665 = vmatpush2.msra.mxu0 0.0
        %666 = vmatprep.subr.mxu0 0.0
        %667 = vmatpush2.msra.mxu0 0.0
        %668 = vmatprep.mubr.f32.mxu0 0.0
        %669 = vmatmul.mubr.f32.gmra.mxu0 %v598
        %v670 = vpop.f32.mrf.mxu0
        %v671 = vadd.f32 0.0, %v670
        %v672 = vpop.f32.mrf.mxu0
        %673 = vdwg.mxu0
        %vm674 = vcmask 15360
        %v676 = vsel %vm674, %v671, 0
        %v679 = vsel %vm286, %v450, 0
        %681 = vmatprep.subr.mxu0 0.0
        %682 = vmatpush1.msra.mxu0 0.0
        %683 = vmatprep.subr.mxu0 0.0
        %684 = vmatpush1.msra.mxu0 0.0
        %685 = vmatprep.subr.mxu0 0.0
        %686 = vmatpush1.msra.mxu0 0.0
        %687 = vmatprep.subr.mxu0 0.0
        %688 = vmatpush1.msra.mxu0 0.0
        %689 = vmatprep.subr.mxu0 0.0
        %690 = vmatpush1.msra.mxu0 0.0
        %691 = vmatprep.subr.mxu0 0.0
        %692 = vmatpush1.msra.mxu0 0.0
        %693 = vmatprep.subr.mxu0 0.0
        %694 = vmatpush1.msra.mxu0 0.0
        %695 = vmatprep.subr.mxu0 0.0
        %696 = vmatpush1.msra.mxu0 0.0
        %697 = vmatprep.subr.mxu0 0.0
        %698 = vmatpush1.msra.mxu0 0.0
        %699 = vmatprep.subr.mxu0 0.0
        %700 = vmatpush1.msra.mxu0 0.0
        %701 = vmatprep.subr.mxu0 0.0
        %702 = vmatpush1.msra.mxu0 0.0
        %703 = vmatprep.subr.mxu0 0.0
        %704 = vmatpush1.msra.mxu0 0.0
        %705 = vmatprep.subr.mxu0 0.0
        %706 = vmatpush1.msra.mxu0 0.0
        %707 = vmatprep.subr.mxu0 0.0
        %708 = vmatpush1.msra.mxu0 0.0
        %709 = vmatprep.subr.mxu0 0.0
        %710 = vmatpush1.msra.mxu0 0.0
        %711 = vmatprep.subr.mxu0 0.0
        %712 = vmatpush1.msra.mxu0 %v679
        %713 = vmatprep.subr.mxu0 0.0
        %714 = vmatpush2.msra.mxu0 0.0
        %715 = vmatprep.subr.mxu0 0.0
        %716 = vmatpush2.msra.mxu0 0.0
        %717 = vmatprep.subr.mxu0 0.0
        %718 = vmatpush2.msra.mxu0 0.0
        %719 = vmatprep.subr.mxu0 0.0
        %720 = vmatpush2.msra.mxu0 0.0
        %721 = vmatprep.subr.mxu0 0.0
        %722 = vmatpush2.msra.mxu0 0.0
        %723 = vmatprep.subr.mxu0 0.0
        %724 = vmatpush2.msra.mxu0 0.0
        %725 = vmatprep.subr.mxu0 0.0
        %726 = vmatpush2.msra.mxu0 0.0
        %727 = vmatprep.subr.mxu0 0.0
        %728 = vmatpush2.msra.mxu0 0.0
        %729 = vmatprep.subr.mxu0 0.0
        %730 = vmatpush2.msra.mxu0 0.0
        %731 = vmatprep.subr.mxu0 0.0
        %732 = vmatpush2.msra.mxu0 0.0
        %733 = vmatprep.subr.mxu0 0.0
        %734 = vmatpush2.msra.mxu0 0.0
        %735 = vmatprep.subr.mxu0 0.0
        %736 = vmatpush2.msra.mxu0 0.0
        %737 = vmatprep.subr.mxu0 0.0
        %738 = vmatpush2.msra.mxu0 0.0
        %739 = vmatprep.subr.mxu0 0.0
        %740 = vmatpush2.msra.mxu0 0.0
        %741 = vmatprep.subr.mxu0 0.0
        %742 = vmatpush2.msra.mxu0 0.0
        %743 = vmatprep.subr.mxu0 0.0
        %744 = vmatpush2.msra.mxu0 0.0
        %745 = vmatprep.mubr.f32.mxu0 0.0
        %746 = vmatmul.mubr.f32.gmra.mxu0 %v676
        %v747 = vpop.f32.mrf.mxu0
        %v748 = vadd.f32 0.0, %v747
        %v749 = vpop.f32.mrf.mxu0
        %750 = vdwg.mxu0
        %v751 = vsub.f32 %v433, %v748
        %v752 = vmul.f32 %v751, %v751
        %753 = vmatprep.subr.mxu0 0.0
        %754 = vmatpush1.msra.mxu0 %v449
        %755 = vmatprep.subr.mxu0 0.0
        %756 = vmatpush1.msra.mxu0 %v448
        %757 = vmatprep.subr.mxu0 0.0
        %758 = vmatpush1.msra.mxu0 %v447
        %759 = vmatprep.subr.mxu0 0.0
        %760 = vmatpush1.msra.mxu0 %v446
        %761 = vmatprep.subr.mxu0 0.0
        %762 = vmatpush1.msra.mxu0 %v445
        %763 = vmatprep.subr.mxu0 0.0
        %764 = vmatpush1.msra.mxu0 %v444
        %765 = vmatprep.subr.mxu0 0.0
        %766 = vmatpush1.msra.mxu0 %v443
        %767 = vmatprep.subr.mxu0 0.0
        %768 = vmatpush1.msra.mxu0 %v442
        %769 = vmatprep.subr.mxu0 0.0
        %770 = vmatpush1.msra.mxu0 %v441
        %771 = vmatprep.subr.mxu0 0.0
        %772 = vmatpush1.msra.mxu0 %v440
        %773 = vmatprep.subr.mxu0 0.0
        %774 = vmatpush1.msra.mxu0 %v439
        %775 = vmatprep.subr.mxu0 0.0
        %776 = vmatpush1.msra.mxu0 %v438
        %777 = vmatprep.subr.mxu0 0.0
        %778 = vmatpush1.msra.mxu0 %v437
        %779 = vmatprep.subr.mxu0 0.0
        %780 = vmatpush1.msra.mxu0 %v436
        %781 = vmatprep.subr.mxu0 0.0
        %782 = vmatpush1.msra.mxu0 %v435
        %783 = vmatprep.subr.mxu0 0.0
        %784 = vmatpush1.msra.mxu0 %v434
        %785 = vmatprep.subr.mxu0 0.0
        %786 = vmatpush2.msra.mxu0 0.0
        %787 = vmatprep.subr.mxu0 0.0
        %788 = vmatpush2.msra.mxu0 0.0
        %789 = vmatprep.subr.mxu0 0.0
        %790 = vmatpush2.msra.mxu0 0.0
        %791 = vmatprep.subr.mxu0 0.0
        %792 = vmatpush2.msra.mxu0 0.0
        %793 = vmatprep.subr.mxu0 0.0
        %794 = vmatpush2.msra.mxu0 0.0
        %795 = vmatprep.subr.mxu0 0.0
        %796 = vmatpush2.msra.mxu0 0.0
        %797 = vmatprep.subr.mxu0 0.0
        %798 = vmatpush2.msra.mxu0 0.0
        %799 = vmatprep.subr.mxu0 0.0
        %800 = vmatpush2.msra.mxu0 0.0
        %801 = vmatprep.subr.mxu0 0.0
        %802 = vmatpush2.msra.mxu0 0.0
        %803 = vmatprep.subr.mxu0 0.0
        %804 = vmatpush2.msra.mxu0 0.0
        %805 = vmatprep.subr.mxu0 0.0
        %806 = vmatpush2.msra.mxu0 0.0
        %807 = vmatprep.subr.mxu0 0.0
        %808 = vmatpush2.msra.mxu0 0.0
        %809 = vmatprep.subr.mxu0 0.0
        %810 = vmatpush2.msra.mxu0 0.0
        %811 = vmatprep.subr.mxu0 0.0
        %812 = vmatpush2.msra.mxu0 0.0
        %813 = vmatprep.subr.mxu0 0.0
        %814 = vmatpush2.msra.mxu0 0.0
        %815 = vmatprep.subr.mxu0 0.0
        %816 = vmatpush2.msra.mxu0 0.0
        %817 = vmatprep.mubr.f32.mxu0 0.0
        %818 = vmatmul.mubr.f32.gmra.mxu0 %v752
        %v819 = vpop.f32.mrf.mxu0
        %v820 = vadd.f32 0.0, %v819
        %v821 = vpop.f32.mrf.mxu0
        %822 = vdwg.mxu0
        %823 = vmatprep.subr.mxu0 0.0
        %824 = vmatpush1.msra.mxu0 0.0
        %825 = vmatprep.subr.mxu0 0.0
        %826 = vmatpush1.msra.mxu0 0.0
        %827 = vmatprep.subr.mxu0 0.0
        %828 = vmatpush1.msra.mxu0 0.0
        %829 = vmatprep.subr.mxu0 0.0
        %830 = vmatpush1.msra.mxu0 0.0
        %831 = vmatprep.subr.mxu0 0.0
        %832 = vmatpush1.msra.mxu0 0.0
        %833 = vmatprep.subr.mxu0 0.0
        %834 = vmatpush1.msra.mxu0 0.0
        %835 = vmatprep.subr.mxu0 0.0
        %836 = vmatpush1.msra.mxu0 0.0
        %837 = vmatprep.subr.mxu0 0.0
        %838 = vmatpush1.msra.mxu0 0.0
        %839 = vmatprep.subr.mxu0 0.0
        %840 = vmatpush1.msra.mxu0 0.0
        %841 = vmatprep.subr.mxu0 0.0
        %842 = vmatpush1.msra.mxu0 0.0
        %843 = vmatprep.subr.mxu0 0.0
        %844 = vmatpush1.msra.mxu0 0.0
        %845 = vmatprep.subr.mxu0 0.0
        %846 = vmatpush1.msra.mxu0 0.0
        %847 = vmatprep.subr.mxu0 0.0
        %848 = vmatpush1.msra.mxu0 0.0
        %849 = vmatprep.subr.mxu0 0.0
        %850 = vmatpush1.msra.mxu0 0.0
        %851 = vmatprep.subr.mxu0 0.0
        %852 = vmatpush1.msra.mxu0 0.0
        %853 = vmatprep.subr.mxu0 0.0
        %854 = vmatpush1.msra.mxu0 %v820
        %855 = vmatprep.subr.mxu0 0.0
        %856 = vmatpush2.msra.mxu0 0.0
        %857 = vmatprep.subr.mxu0 0.0
        %858 = vmatpush2.msra.mxu0 0.0
        %859 = vmatprep.subr.mxu0 0.0
        %860 = vmatpush2.msra.mxu0 0.0
        %861 = vmatprep.subr.mxu0 0.0
        %862 = vmatpush2.msra.mxu0 0.0
        %863 = vmatprep.subr.mxu0 0.0
        %864 = vmatpush2.msra.mxu0 0.0
        %865 = vmatprep.subr.mxu0 0.0
        %866 = vmatpush2.msra.mxu0 0.0
        %867 = vmatprep.subr.mxu0 0.0
        %868 = vmatpush2.msra.mxu0 0.0
        %869 = vmatprep.subr.mxu0 0.0
        %870 = vmatpush2.msra.mxu0 0.0
        %871 = vmatprep.subr.mxu0 0.0
        %872 = vmatpush2.msra.mxu0 0.0
        %873 = vmatprep.subr.mxu0 0.0
        %874 = vmatpush2.msra.mxu0 0.0
        %875 = vmatprep.subr.mxu0 0.0
        %876 = vmatpush2.msra.mxu0 0.0
        %877 = vmatprep.subr.mxu0 0.0
        %878 = vmatpush2.msra.mxu0 0.0
        %879 = vmatprep.subr.mxu0 0.0
        %880 = vmatpush2.msra.mxu0 0.0
        %881 = vmatprep.subr.mxu0 0.0
        %882 = vmatpush2.msra.mxu0 0.0
        %883 = vmatprep.subr.mxu0 0.0
        %884 = vmatpush2.msra.mxu0 0.0
        %885 = vmatprep.subr.mxu0 0.0
        %886 = vmatpush2.msra.mxu0 0.0
        %887 = vmatprep.mubr.f32.mxu0 0.0
        %888 = vmatmul.mubr.f32.gmra.mxu0 %v525
        %v889 = vpop.f32.mrf.mxu0
        %v890 = vadd.f32 0.0, %v889
        %v891 = vpop.f32.mrf.mxu0
        %892 = vdwg.mxu0
        %v894 = vsel %vm600, %v890, 0
        %896 = vmatprep.subr.mxu0 0.0
        %897 = vmatpush1.msra.mxu0 0.0
        %898 = vmatprep.subr.mxu0 0.0
        %899 = vmatpush1.msra.mxu0 0.0
        %900 = vmatprep.subr.mxu0 0.0
        %901 = vmatpush1.msra.mxu0 0.0
        %902 = vmatprep.subr.mxu0 0.0
        %903 = vmatpush1.msra.mxu0 0.0
        %904 = vmatprep.subr.mxu0 0.0
        %905 = vmatpush1.msra.mxu0 0.0
        %906 = vmatprep.subr.mxu0 0.0
        %907 = vmatpush1.msra.mxu0 0.0
        %908 = vmatprep.subr.mxu0 0.0
        %909 = vmatpush1.msra.mxu0 0.0
        %910 = vmatprep.subr.mxu0 0.0
        %911 = vmatpush1.msra.mxu0 0.0
        %912 = vmatprep.subr.mxu0 0.0
        %913 = vmatpush1.msra.mxu0 0.0
        %914 = vmatprep.subr.mxu0 0.0
        %915 = vmatpush1.msra.mxu0 0.0
        %916 = vmatprep.subr.mxu0 0.0
        %917 = vmatpush1.msra.mxu0 0.0
        %918 = vmatprep.subr.mxu0 0.0
        %919 = vmatpush1.msra.mxu0 0.0
        %920 = vmatprep.subr.mxu0 0.0
        %921 = vmatpush1.msra.mxu0 0.0
        %922 = vmatprep.subr.mxu0 0.0
        %923 = vmatpush1.msra.mxu0 0.0
        %924 = vmatprep.subr.mxu0 0.0
        %925 = vmatpush1.msra.mxu0 0.0
        %926 = vmatprep.subr.mxu0 0.0
        %927 = vmatpush1.msra.mxu0 %v894
        %928 = vmatprep.subr.mxu0 0.0
        %929 = vmatpush2.msra.mxu0 0.0
        %930 = vmatprep.subr.mxu0 0.0
        %931 = vmatpush2.msra.mxu0 0.0
        %932 = vmatprep.subr.mxu0 0.0
        %933 = vmatpush2.msra.mxu0 0.0
        %934 = vmatprep.subr.mxu0 0.0
        %935 = vmatpush2.msra.mxu0 0.0
        %936 = vmatprep.subr.mxu0 0.0
        %937 = vmatpush2.msra.mxu0 0.0
        %938 = vmatprep.subr.mxu0 0.0
        %939 = vmatpush2.msra.mxu0 0.0
        %940 = vmatprep.subr.mxu0 0.0
        %941 = vmatpush2.msra.mxu0 0.0
        %942 = vmatprep.subr.mxu0 0.0
        %943 = vmatpush2.msra.mxu0 0.0
        %944 = vmatprep.subr.mxu0 0.0
        %945 = vmatpush2.msra.mxu0 0.0
        %946 = vmatprep.subr.mxu0 0.0
        %947 = vmatpush2.msra.mxu0 0.0
        %948 = vmatprep.subr.mxu0 0.0
        %949 = vmatpush2.msra.mxu0 0.0
        %950 = vmatprep.subr.mxu0 0.0
        %951 = vmatpush2.msra.mxu0 0.0
        %952 = vmatprep.subr.mxu0 0.0
        %953 = vmatpush2.msra.mxu0 0.0
        %954 = vmatprep.subr.mxu0 0.0
        %955 = vmatpush2.msra.mxu0 0.0
        %956 = vmatprep.subr.mxu0 0.0
        %957 = vmatpush2.msra.mxu0 0.0
        %958 = vmatprep.subr.mxu0 0.0
        %959 = vmatpush2.msra.mxu0 0.0
        %960 = vmatprep.mubr.f32.mxu0 0.0
        %961 = vmatmul.mubr.f32.gmra.mxu0 %v598
        %v962 = vpop.f32.mrf.mxu0
        %v963 = vadd.f32 1e-05, %v962
        %v964 = vpop.f32.mrf.mxu0
        %965 = vdwg.mxu0
        %v966 = vrsqrt.pop %v963
        %967 = vset.pattern.permute.xlu0 1
        %968 = vperm.xlu0 %967, %v427
        %v969 = vpop.permute.xlu0 %968
        %v971 = vmul.f32 %v969, %v966
        %v973 = vsel %vm674, %v971, 0
        %975 = vmatprep.subr.mxu0 0.0
        %976 = vmatpush1.msra.mxu0 0.0
        %977 = vmatprep.subr.mxu0 0.0
        %978 = vmatpush1.msra.mxu0 0.0
        %979 = vmatprep.subr.mxu0 0.0
        %980 = vmatpush1.msra.mxu0 0.0
        %981 = vmatprep.subr.mxu0 0.0
        %982 = vmatpush1.msra.mxu0 0.0
        %983 = vmatprep.subr.mxu0 0.0
        %984 = vmatpush1.msra.mxu0 0.0
        %985 = vmatprep.subr.mxu0 0.0
        %986 = vmatpush1.msra.mxu0 0.0
        %987 = vmatprep.subr.mxu0 0.0
        %988 = vmatpush1.msra.mxu0 0.0
        %989 = vmatprep.subr.mxu0 0.0
        %990 = vmatpush1.msra.mxu0 0.0
        %991 = vmatprep.subr.mxu0 0.0
        %992 = vmatpush1.msra.mxu0 0.0
        %993 = vmatprep.subr.mxu0 0.0
        %994 = vmatpush1.msra.mxu0 0.0
        %995 = vmatprep.subr.mxu0 0.0
        %996 = vmatpush1.msra.mxu0 0.0
        %997 = vmatprep.subr.mxu0 0.0
        %998 = vmatpush1.msra.mxu0 0.0
        %999 = vmatprep.subr.mxu0 0.0
        %1000 = vmatpush1.msra.mxu0 0.0
        %1001 = vmatprep.subr.mxu0 0.0
        %1002 = vmatpush1.msra.mxu0 0.0
        %1003 = vmatprep.subr.mxu0 0.0
        %1004 = vmatpush1.msra.mxu0 0.0
        %1005 = vmatprep.subr.mxu0 0.0
        %1006 = vmatpush1.msra.mxu0 %v679
        %1007 = vmatprep.subr.mxu0 0.0
        %1008 = vmatpush2.msra.mxu0 0.0
        %1009 = vmatprep.subr.mxu0 0.0
        %1010 = vmatpush2.msra.mxu0 0.0
        %1011 = vmatprep.subr.mxu0 0.0
        %1012 = vmatpush2.msra.mxu0 0.0
        %1013 = vmatprep.subr.mxu0 0.0
        %1014 = vmatpush2.msra.mxu0 0.0
        %1015 = vmatprep.subr.mxu0 0.0
        %1016 = vmatpush2.msra.mxu0 0.0
        %1017 = vmatprep.subr.mxu0 0.0
        %1018 = vmatpush2.msra.mxu0 0.0
        %1019 = vmatprep.subr.mxu0 0.0
        %1020 = vmatpush2.msra.mxu0 0.0
        %1021 = vmatprep.subr.mxu0 0.0
        %1022 = vmatpush2.msra.mxu0 0.0
        %1023 = vmatprep.subr.mxu0 0.0
        %1024 = vmatpush2.msra.mxu0 0.0
        %1025 = vmatprep.subr.mxu0 0.0
        %1026 = vmatpush2.msra.mxu0 0.0
        %1027 = vmatprep.subr.mxu0 0.0
        %1028 = vmatpush2.msra.mxu0 0.0
        %1029 = vmatprep.subr.mxu0 0.0
        %1030 = vmatpush2.msra.mxu0 0.0
        %1031 = vmatprep.subr.mxu0 0.0
        %1032 = vmatpush2.msra.mxu0 0.0
        %1033 = vmatprep.subr.mxu0 0.0
        %1034 = vmatpush2.msra.mxu0 0.0
        %1035 = vmatprep.subr.mxu0 0.0
        %1036 = vmatpush2.msra.mxu0 0.0
        %1037 = vmatprep.subr.mxu0 0.0
        %1038 = vmatpush2.msra.mxu0 0.0
        %1039 = vmatprep.mubr.f32.mxu0 0.0
        %1040 = vmatmul.mubr.f32.gmra.mxu0 %v973
        %v1041 = vpop.f32.mrf.mxu0
        %v1042 = vadd.f32 0.0, %v1041
        %v1043 = vpop.f32.mrf.mxu0
        %1044 = vdwg.mxu0
        %v1045 = vmul.f32 %v751, %v1042
        %1046 = vset.pattern.permute.xlu0 2
        %1047 = vperm.xlu0 %1046, %v427
        %v1048 = vpop.permute.xlu0 %1047
        %v1050 = vadd.f32 %v1045, %v1048
        %v1051 = vmin.f32 %v1050, 20.0
        %v1052 = vmul.f32 %v1051, 1.442695
        %v1053 = vpow.pop %v1052
        %v1054 = vadd.f32 %v1053, 1.0
        %v1055 = vmul.f32 %v1054, %v1054
        %v1056 = vadd.f32 %v1055, 1.0
        %v1057 = vrcp.pop %v1056
        %v1058 = vmul.f32 %v1056, %v1057
        %v1059 = vsub.f32 2.0, %v1058
        %v1060 = vmul.f32 %v1057, %v1059
        %v1061 = vsub.f32 %v1055, 1.0
        %v1062 = vmul.f32 %v1050, %v1061
        %v1063 = vmul.f32 %v1062, %v1060
        %1064 = vst [vmem:[%s269] sm:$0xff] %v1063
        %s1065 = sand.u32 %s181, 1
        %s1066 = scalar_lea.sflag [#allocation3], %s1065
        %s1067 = sand.u32 %s181, 1
        %s1068 = smul.addr %s1067, 8
        %s1069 = scalar_lea.vmem [#allocation2], %s1068
        // Predicated region
        $region49: #{tpu_custom_call.1} parent=47 // pred_check
          %p1070 = pneg %p191
        $region50: #{tpu_custom_call.1} parent=47 // pred_check_branch
          %1072 = sbr.rel (%p1070) target = $region52
        $region51: #{tpu_custom_call.1} parent=47 // pred_region
          %s1074 = ssub.s32 128, 128
          %1075 = vsyncadd %s1066, %s1074
          %s1076 = smul.addr %s21, 128
          %s1077 = scalar_lea.hbm %s7, %s1076
          %s1079 = sshll.u32 %s1069, 4
          %s1080 = int_to_ptr.vmem [resolvable:$true] %s1079
          %1082 = dma.vmem_to_hbm [thread:$0]  %s1080, 128, %s1077, %s1066
        $region52: #{tpu_custom_call.1} parent=47 // pred_fallthru
          _
      $region48: #{tpu_custom_call.1} parent=5 // pred_fallthru
        _
      %p1083 = scmp.le.s32.totalorder 2, %s16
      // Predicated region
      $region53: #{tpu_custom_call.1} parent=5 // pred_check
        %p1084 = pneg %p1083
      $region54: #{tpu_custom_call.1} parent=5 // pred_check_branch
        %1086 = sbr.rel (%p1084) target = $region56
      $region55: #{tpu_custom_call.1} parent=5 // pred_region
        %s1087 = ssub.s32 %s16, 2
        // Predicated region
        $region57: #{tpu_custom_call.1} parent=55 // pred_check
          %p1088 = pneg %p197
        $region58: #{tpu_custom_call.1} parent=55 // pred_check_branch
          %1090 = sbr.rel (%p1088) target = $region60
        $region59: #{tpu_custom_call.1} parent=55 // pred_region
          %s1091 = sand.u32 %s182, 1
          %s1092 = scalar_lea.sflag [#allocation3], %s1091
          %s1093 = sand.u32 %s182, 1
          %s1094 = smul.addr %s1093, 8
          %s1095 = scalar_lea.vmem [#allocation2], %s1094
          %1096 = dma.done %s1092, 128
        $region60: #{tpu_custom_call.1} parent=55 // pred_fallthru
          _
      $region56: #{tpu_custom_call.1} parent=5 // pred_fallthru
        _
    $region6: #{tpu_custom_call.1} parent=1 // loop_footer
      %s20 = sadd.s32 1, %s16
    $region7: #{tpu_custom_call.1} parent=1 // loop_footer_branch
      %15 = sbr.rel target = $region3
    $region8: #{tpu_custom_call.1} parent=1 // loop_exit
      _
    %1097 = vsyncpa [#allocation3], 1
    %s1098 = scalar_lea.sflag [#allocation3], 1
    %1099 = vsyncpa %s1098, 1

</llo_original>
